<compile_context>
chip_gen: v6e
topology: v6e:2x2x1
jax: 0.10.0
libtpu: 0.0.40
codegen_flags: <defaults>
</compile_context>

<pallas_src>
import math

import jax
import jax.numpy as jnp
from jax.experimental import pallas as pl
from jax.experimental.pallas import tpu as pltpu


def _bias_relu_kernel(x_ref, b_ref, o_ref):
    # x_ref: (TM, TL) tile of the flattened input.
    # b_ref: (TM, 1) per-row bias column or (1, TL) bias strip — broadcasts on the VPU.
    # o_ref: (TM, TL) lane-dense output tile.
    s = x_ref[...] + b_ref[...]
    o_ref[...] = jnp.maximum(s, 0).astype(o_ref.dtype)


def _round_up(a: int, b: int) -> int:
    return -(-a // b) * b


def _sublane_multiple(dtype) -> int:
    # f32 packs (8,128) per vreg; bf16 (16,128); int8/fp8 (32,128).
    return max(8, 32 // jnp.dtype(dtype).itemsize)


def _num_tensorcores_per_chip() -> int:
    # v7x has 2 TensorCores per chip; v5e / v6e have 1.
    try:
        kind = (getattr(jax.devices()[0], "device_kind", "") or "").lower()
    except Exception:
        return 1
    return 2 if "7" in kind else 1


_NUM_TC = _num_tensorcores_per_chip()


def _choose_tiles(rows: int, lanes: int, sub: int) -> tuple[int, int]:
    """Largest useful (row, lane) tiles; lane tile stays a multiple of 128."""
    tl = lanes if lanes < 128 else min(_round_up(lanes, 128), 1024)
    tm = rows if rows < sub else min(_round_up(rows, sub), 512)
    if (_NUM_TC >= 2 and rows >= 2 * sub
            and pl.cdiv(rows, tm) * pl.cdiv(lanes, tl) < 2):
        # Two TensorCores but only one grid step: split the row axis in half
        # (keeps stores lane-dense) so both cores get a "parallel" step.
        tm = _round_up(pl.cdiv(rows, 2), sub)
    return tm, tl


@jax.jit
def bias_layer_forward(x, bias):
    """BiasLayer.forward: relu(x + bias), bias broadcast (right-aligned) to x."""
    xs = tuple(x.shape)
    if bias.ndim > x.ndim:
        raise ValueError("bias has more dims than x")
    bs = (1,) * (x.ndim - bias.ndim) + tuple(bias.shape)

    out_dtype = jnp.result_type(x.dtype, bias.dtype)

    # Count trailing axes over which the bias is constant.
    nlane_const = 0
    for _, be in zip(reversed(xs), reversed(bs)):
        if be != 1:
            break
        nlane_const += 1

    if nlane_const > 0:
        # Per-row bias (e.g. bias shape (C, 1, 1)): trailing constant axes fold
        # into lanes, bias collapses to a (rows, 1) column (`rows` elements).
        rows = math.prod(xs[:x.ndim - nlane_const])
        lanes = math.prod(xs[x.ndim - nlane_const:])
        b2d = jnp.broadcast_to(
            bias.reshape(bs),
            xs[:x.ndim - nlane_const] + (1,) * nlane_const,
        ).reshape(rows, 1).astype(out_dtype)
        per_row = True
    else:
        # Bias varies on the last axis: fold everything from the first
        # bias-varying axis into lanes -> (1, lanes) strip (`lanes` elements),
        # no x-sized broadcast.
        s = next(i for i, be in enumerate(bs) if be != 1)
        rows = math.prod(xs[:s])
        lanes = math.prod(xs[s:])
        b2d = jnp.broadcast_to(
            bias.reshape(bs[s:]), xs[s:]).reshape(1, lanes).astype(out_dtype)
        per_row = False

    x2d = x.reshape(rows, lanes)                      # contiguous reshape: free

    sub = _sublane_multiple(x.dtype)
    tm, tl = _choose_tiles(rows, lanes, sub)
    grid = (pl.cdiv(rows, tm), pl.cdiv(lanes, tl))    # ragged edge blocks masked by Pallas

    if per_row:
        b_spec = pl.BlockSpec((tm, 1), lambda i, j: (i, 0))
        b_bytes = rows * b2d.dtype.itemsize
    else:
        b_spec = pl.BlockSpec((1, tl), lambda i, j: (0, j))
        b_bytes = lanes * b2d.dtype.itemsize

    out2d = pl.pallas_call(
        _bias_relu_kernel,
        out_shape=jax.ShapeDtypeStruct((rows, lanes), out_dtype),
        grid=grid,
        in_specs=[pl.BlockSpec((tm, tl), lambda i, j: (i, j)), b_spec],
        out_specs=pl.BlockSpec((tm, tl), lambda i, j: (i, j)),
        compiler_params=pltpu.CompilerParams(
            dimension_semantics=("parallel", "parallel")),
        cost_estimate=pl.CostEstimate(
            flops=2 * rows * lanes,                    # add + max
            transcendentals=0,
            bytes_accessed=rows * lanes * (x.dtype.itemsize
                                           + jnp.dtype(out_dtype).itemsize)
                           + b_bytes),
    )(x2d, b2d)

    return out2d.reshape(xs)


if __name__ == "__main__":
    key = jax.random.PRNGKey(0)
    kx, kb, kb2 = jax.random.split(key, 3)

    # Module config: BiasLayer(shape=(4, 1, 1)) applied to a (2, 4, 16, 16)
    # activation — a per-channel learnable bias followed by ReLU.
    x = jax.random.normal(kx, (2, 4, 16, 16), dtype=jnp.float32)
    bias = jax.random.normal(kb, (4, 1, 1), dtype=jnp.float32) * 0.1   # torch.randn(shape)*0.1

    out = jax.block_until_ready(bias_layer_forward(x, bias))
    ref = jnp.maximum(x + bias, 0.0)
    assert out.shape == x.shape, out.shape
    assert jnp.allclose(out, ref, atol=1e-6, rtol=1e-6), "mismatch (per-channel bias)"

    # Strip path: a bias with full spatial extent (varies along the last axes).
    bias2 = jax.random.normal(kb2, (16, 16), dtype=jnp.float32) * 0.1
    out2 = jax.block_until_ready(bias_layer_forward(x, bias2))
    ref2 = jnp.maximum(x + bias2, 0.0)
    assert jnp.allclose(out2, ref2, atol=1e-6, rtol=1e-6), "mismatch (spatial bias)"

    print("KERNEL_OK")
</pallas_src>

<mosaic_0001>
module attributes {stable_mosaic.version = 11 : i64} {
  func.func @_bias_relu_kernel(%arg0: i32, %arg1: i32, %arg2: memref<8x256xf32, #tpu.memory_space<vmem>>, %arg3: memref<8x1xf32, #tpu.memory_space<vmem>>, %arg4: memref<8x256xf32, #tpu.memory_space<vmem>>) attributes {dimension_semantics = [#tpu.dimension_semantics<parallel>, #tpu.dimension_semantics<parallel>], iteration_bounds = array<i64: 1, 1>, scalar_prefetch = 0 : i64, scratch_operands = 0 : i64, tpu.core_type = #tpu.core_type<tc>, window_params = [{transform_indices = @transform_0, window_bounds = array<i64: 8, 256>}, {transform_indices = @transform_1, window_bounds = array<i64: 8, 1>}, {transform_indices = @transform_2, window_bounds = array<i64: 8, 256>}]} {
    %c0 = arith.constant 0 : index
    %c0_0 = arith.constant 0 : index
    %0 = vector.load %arg2[%c0, %c0_0] : memref<8x256xf32, #tpu.memory_space<vmem>>, vector<8x256xf32>
    %c0_1 = arith.constant 0 : index
    %c0_2 = arith.constant 0 : index
    %1 = vector.load %arg3[%c0_1, %c0_2] : memref<8x1xf32, #tpu.memory_space<vmem>>, vector<8x1xf32>
    %2 = vector.broadcast %1 : vector<8x1xf32> to vector<8x256xf32>
    %3 = arith.addf %0, %2 : vector<8x256xf32>
    %cst = arith.constant 0.000000e+00 : f32
    %4 = vector.broadcast %cst : f32 to vector<8x256xf32>
    %5 = arith.maximumf %3, %4 : vector<8x256xf32>
    %c0_3 = arith.constant 0 : index
    %c0_4 = arith.constant 0 : index
    %6 = vector.load %arg4[%c0_3, %c0_4] : memref<8x256xf32, #tpu.memory_space<vmem>>, vector<8x256xf32>
    tpu.vector_store %arg4[%c0_3, %c0_4], %5 {strides = array<i32>} : memref<8x256xf32, #tpu.memory_space<vmem>>, vector<8x256xf32>,
    return
  }
  func.func @transform_0(%arg0: i32, %arg1: i32) -> (i32, i32) {
    %c0_i32 = arith.constant 0 : i32
    return %arg0, %arg1 : i32, i32
  }
  func.func @transform_1(%arg0: i32, %arg1: i32) -> (i32, i32) {
    %c0_i32 = arith.constant 0 : i32
    %c0_i32_0 = arith.constant 0 : i32
    return %arg0, %c0_i32 : i32, i32
  }
  func.func @transform_2(%arg0: i32, %arg1: i32) -> (i32, i32) {
    %c0_i32 = arith.constant 0 : i32
    return %arg0, %arg1 : i32, i32
  }
}

</mosaic_0001>

<llo_original>
// kernel: bias_layer_forward.1
$region0: #{bias_layer_forward.1}
  #allocation0 [shape = 'u32[]', space=smem, size = 0x4, offset = 0x4, fixed_abs, tag = 'smem constant byte address 0x4 - core index']
  #allocation1 [shape = 'u32[144,128]{1,0:T(1,128)}', space=vmem, size = 0x12000, scoped, tag = 'internal scratch']
  %s0 = inlined_call_operand.vmem [shape: f32[8,256], index: 0, kind: input, shape index: {}]
  %s1 = inlined_call_operand.vmem [shape: f32[8,1], index: 1, kind: input, shape index: {}]
  %s2 = inlined_call_operand.vmem [shape: f32[8,256], index: 2, kind: output, shape index: {}]
  %s3 = sld [smem:[#allocation0]]
  $region18: #{bias_layer_forward.1} parent=0
    _
  %s5 = ssub.s32 1, %s3
  %s6 = scalar_select 0, %s5, %s3
  // Predicated region
  $region2: #{bias_layer_forward.1} parent=0 // pred_check
    _
  $region3: #{bias_layer_forward.1} parent=0 // pred_check_branch
    %8 = sbr.rel (0) target = $region5
  $region4: #{bias_layer_forward.1} parent=0 // pred_region
    _
  $region5: #{bias_layer_forward.1} parent=0 // pred_fallthru
    _
  // Predicated region
  $region6: #{bias_layer_forward.1} parent=0 // pred_check
    _
  $region7: #{bias_layer_forward.1} parent=0 // pred_check_branch
    %10 = sbr.rel (0) target = $region9
  $region8: #{bias_layer_forward.1} parent=0 // pred_region
    _
  $region9: #{bias_layer_forward.1} parent=0 // pred_fallthru
    _
  %v11 = vld [vmem:[%s0] sm:$0xff]
  %v12 = vld [vmem:[%s0 + $0x8] sm:$0xff]
  %v13 = vld [vmem:[%s1] sm:$0xff]
  %15 = vset.pattern.permute.xlu0 0
  %16 = vperm.xlu0 %15, %v13
  %v17 = vpop.permute.xlu0 %16
  %v19 = vadd.f32 %v11, %v17
  %v20 = vadd.f32 %v12, %v17
  %v21 = vmax.f32 %v19, 0.0
  %v22 = vmax.f32 %v20, 0.0
  %23 = vst [vmem:[%s2] sm:$0xff] %v21
  %24 = vst [vmem:[%s2 + $0x8] sm:$0xff] %v22
  // Predicated region
  $region10: #{bias_layer_forward.1} parent=0 // pred_check
    _
  $region11: #{bias_layer_forward.1} parent=0 // pred_check_branch
    %26 = sbr.rel (0) target = $region13
  $region12: #{bias_layer_forward.1} parent=0 // pred_region
    _
  $region13: #{bias_layer_forward.1} parent=0 // pred_fallthru
    _
  // Predicated region
  $region14: #{bias_layer_forward.1} parent=0 // pred_check
    _
  $region15: #{bias_layer_forward.1} parent=0 // pred_check_branch
    %28 = sbr.rel (0) target = $region17
  $region16: #{bias_layer_forward.1} parent=0 // pred_region
    _
  $region17: #{bias_layer_forward.1} parent=0 // pred_fallthru
    _

</llo_original>
